<compile_context>
chip_gen: v5e
topology: v5e:2x2
jax: 0.10.0
libtpu: 0.0.40
codegen_flags: <defaults>
</compile_context>

<pallas_src>
import functools

import jax
import jax.numpy as jnp
from jax.experimental import pallas as pl
from jax.experimental.pallas import tpu as pltpu

_LANE = 128
_SUBLANE = 8


def _conv1d_kernel(x_ref, w_ref, b_ref, o_ref, *, k_size, t_out):
    """Whole problem in one grid step, K accumulated MXU matmuls.

    x_ref: (B, T_pad, C_in)       zero-padded input, bf16 (VMEM)
    w_ref: (K*C_in, C_out_pad)    im2col-flattened weights, bf16, lane-dense N
    b_ref: (1, C_out_pad)         zero-padded bias, f32
    o_ref: (B*T_out, C_out_pad)   flat lane-dense output slab (f32)
    """
    B, _, C_in = x_ref.shape
    M = o_ref.shape[0]  # B * t_out (multiple of 8, asserted in wrapper)

    acc = jnp.zeros(o_ref.shape, jnp.float32)
    # Unrolled K-loop: each iteration is a sublane-offset load (no lane
    # relayout) and one MXU push with f32 accumulation.
    for k in range(k_size):
        xk = x_ref[:, pl.ds(k, t_out), :].reshape(M, C_in)
        wk = w_ref[pl.ds(k * C_in, C_in), :]
        acc = acc + jnp.dot(xk, wk, preferred_element_type=jnp.float32)

    acc = acc + b_ref[...]          # f32 bias add (broadcast over rows)
    o_ref[...] = acc.astype(o_ref.dtype)


def prepare_conv_params(weight, bias, *, compute_dtype=jnp.bfloat16):
    """One-time parameter prep (do NOT call per forward).

    weight: (K, C_in, C_out); bias: (C_out,).
    Returns (w2, b2): im2col-flattened weight (K*C_in, C_pad) in compute_dtype
    and lane-padded f32 bias (1, C_pad).
    """
    K, C_in, C_out = weight.shape
    c_pad = ((C_out + _LANE - 1) // _LANE) * _LANE
    w2 = jnp.pad(weight.reshape(K * C_in, C_out),
                 ((0, 0), (0, c_pad - C_out))).astype(compute_dtype)
    b2 = jnp.pad(bias.reshape(1, C_out),
                 ((0, 0), (0, c_pad - C_out))).astype(jnp.float32)
    return w2, b2


@functools.partial(jax.jit,
                   static_argnames=("kernel_size", "padding", "out_channels"))
def conv1d_pallas(x, w2, b2, *, kernel_size, padding, out_channels):
    """x: (B, T, C_in); w2/b2 from prepare_conv_params.

    Equivalent to Conv(C_in, C_out, kernel_size=K, stride=1, padding=padding,
    dilation=1, bias=True).forward(x) with channels-last I/O (the two
    transposes in the PyTorch forward cancel out).
    """
    B, T, C_in = x.shape
    K = kernel_size
    c_pad = w2.shape[1]
    assert w2.shape[0] == K * C_in, "weight/input channel mismatch"

    T_pad = T + 2 * padding
    T_out = T_pad - K + 1           # stride=1, dilation=1 only
    M = B * T_out
    assert M % _SUBLANE == 0, "fused B*T_out must be a multiple of 8"

    # Zero-pad time axis + bf16 cast in plain JAX (glue); hot path in kernel.
    x_pad = jnp.pad(x, ((0, 0), (padding, padding), (0, 0))).astype(w2.dtype)

    kern = functools.partial(_conv1d_kernel, k_size=K, t_out=T_out)
    out = pl.pallas_call(
        kern,
        out_shape=jax.ShapeDtypeStruct((M, c_pad), x.dtype),
        grid=(1,),
        in_specs=[
            pl.BlockSpec((B, T_pad, C_in), lambda i: (0, 0, 0)),
            pl.BlockSpec((K * C_in, c_pad), lambda i: (0, 0)),
            pl.BlockSpec((1, c_pad), lambda i: (0, 0)),
        ],
        out_specs=pl.BlockSpec((M, c_pad), lambda i: (0, 0)),
        compiler_params=pltpu.CompilerParams(
            dimension_semantics=("arbitrary",),
            vmem_limit_bytes=32 * 1024 * 1024,
        ),
    )(x_pad, w2, b2)

    # Channel slice + reshape back to (B, T_out, C_out) in the wrapper so the
    # in-kernel store stays a single unmasked lane-dense vst.
    return out[:, :out_channels].reshape(B, T_out, out_channels)


def _reference_conv1d(x, weight, bias, padding):
    """Pure-JAX f32 reference matching nn.Conv1d semantics (channels-last)."""
    x_pad = jnp.pad(x, ((0, 0), (padding, padding), (0, 0)))
    K = weight.shape[0]
    T_out = x_pad.shape[1] - K + 1
    out = jnp.zeros((x.shape[0], T_out, weight.shape[2]), jnp.float32)
    for k in range(K):
        out = out + jnp.einsum(
            "btc,cd->btd", x_pad[:, k:k + T_out, :].astype(jnp.float32),
            weight[k].astype(jnp.float32))
    return (out + bias[None, None, :]).astype(x.dtype)


if __name__ == "__main__":
    # Module hyperparameters for this synthetic instance.
    B, T = 2, 16
    C_in, C_out, K, padding = 32, 32, 3, 1

    key = jax.random.PRNGKey(0)
    kx, kw, kb = jax.random.split(key, 3)

    x = jax.random.normal(kx, (B, T, C_in), dtype=jnp.float32)

    # Deterministic Xavier-uniform init, mirroring
    # nn.init.xavier_uniform_(conv.weight) with gain=1 (w_init='linear').
    # PyTorch weight layout is (C_out, C_in, K); stored pre-transposed as
    # (K, C_in, C_out) for the kernel's matmuls.
    fan_in, fan_out = C_in * K, C_out * K
    limit = jnp.sqrt(6.0 / (fan_in + fan_out))
    weight = jax.random.uniform(
        kw, (K, C_in, C_out), minval=-limit, maxval=limit, dtype=jnp.float32)
    bias = jax.random.uniform(
        kb, (C_out,), minval=-1.0 / jnp.sqrt(fan_in),
        maxval=1.0 / jnp.sqrt(fan_in), dtype=jnp.float32)

    # One-time parameter prep (im2col flatten + lane pad + bf16 cast).
    w2, b2 = prepare_conv_params(weight, bias, compute_dtype=jnp.bfloat16)

    y = conv1d_pallas(x, w2, b2, kernel_size=K, padding=padding,
                      out_channels=C_out)
    y = jax.block_until_ready(y)

    y_ref = _reference_conv1d(x, weight, bias, padding)
    assert y.shape == (B, T, C_out), y.shape
    # bf16 MXU operands (f32 accumulation): tolerance loosened accordingly.
    assert jnp.allclose(y, y_ref, atol=5e-2, rtol=5e-2), (
        float(jnp.max(jnp.abs(y - y_ref))))

    print("KERNEL_OK")
</pallas_src>

<mosaic_0001>
module attributes {stable_mosaic.version = 11 : i64} {
  func.func @_conv1d_kernel(%arg0: i32, %arg1: memref<2x18x32xbf16, #tpu.memory_space<vmem>>, %arg2: memref<96x128xbf16, #tpu.memory_space<vmem>>, %arg3: memref<1x128xf32, #tpu.memory_space<vmem>>, %arg4: memref<32x128xf32, #tpu.memory_space<vmem>>) attributes {dimension_semantics = [#tpu.dimension_semantics<arbitrary>], iteration_bounds = array<i64: 1>, scalar_prefetch = 0 : i64, scratch_operands = 0 : i64, tpu.core_type = #tpu.core_type<tc>, window_params = [{pipeline_mode = #tpu.pipeline_mode<synchronous>, transform_indices = @transform_0, window_bounds = array<i64: 2, 18, 32>}, {pipeline_mode = #tpu.pipeline_mode<synchronous>, transform_indices = @transform_1, window_bounds = array<i64: 96, 128>}, {pipeline_mode = #tpu.pipeline_mode<synchronous>, transform_indices = @transform_2, window_bounds = array<i64: 1, 128>}, {pipeline_mode = #tpu.pipeline_mode<synchronous>, transform_indices = @transform_3, window_bounds = array<i64: 32, 128>}]} {
    %cst = arith.constant 0.000000e+00 : f32
    %0 = vector.broadcast %cst : f32 to vector<32x128xf32>
    %c0 = arith.constant 0 : index
    %c0_0 = arith.constant 0 : index
    %c0_1 = arith.constant 0 : index
    %1 = vector.load %arg1[%c0, %c0_0, %c0_1] : memref<2x18x32xbf16, #tpu.memory_space<vmem>>, vector<2x16x32xbf16>
    %2 = vector.shape_cast %1 : vector<2x16x32xbf16> to vector<32x32xbf16>
    %c0_2 = arith.constant 0 : index
    %c0_3 = arith.constant 0 : index
    %3 = vector.load %arg2[%c0_2, %c0_3] : memref<96x128xbf16, #tpu.memory_space<vmem>>, vector<32x128xbf16>
    %cst_4 = arith.constant dense<0.000000e+00> : vector<32x128xf32>
    %4 = tpu.matmul %2, %3, %cst_4 {dimension_numbers = #tpu.dot_dimension_numbers<[1], [0], [0], [1], [0, 0, 1, 1], [], []>} : vector<32x32xbf16>, vector<32x128xbf16>, vector<32x128xf32> -> vector<32x128xf32>
    %5 = arith.addf %0, %4 : vector<32x128xf32>
    %c0_5 = arith.constant 0 : index
    %c1 = arith.constant 1 : index
    %c0_6 = arith.constant 0 : index
    %6 = vector.load %arg1[%c0_5, %c1, %c0_6] : memref<2x18x32xbf16, #tpu.memory_space<vmem>>, vector<2x16x32xbf16>
    %7 = vector.shape_cast %6 : vector<2x16x32xbf16> to vector<32x32xbf16>
    %c32 = arith.constant 32 : index
    %c0_7 = arith.constant 0 : index
    %8 = vector.load %arg2[%c32, %c0_7] : memref<96x128xbf16, #tpu.memory_space<vmem>>, vector<32x128xbf16>
    %cst_8 = arith.constant dense<0.000000e+00> : vector<32x128xf32>
    %9 = tpu.matmul %7, %8, %cst_8 {dimension_numbers = #tpu.dot_dimension_numbers<[1], [0], [0], [1], [0, 0, 1, 1], [], []>} : vector<32x32xbf16>, vector<32x128xbf16>, vector<32x128xf32> -> vector<32x128xf32>
    %10 = arith.addf %5, %9 : vector<32x128xf32>
    %c0_9 = arith.constant 0 : index
    %c2 = arith.constant 2 : index
    %c0_10 = arith.constant 0 : index
    %11 = vector.load %arg1[%c0_9, %c2, %c0_10] : memref<2x18x32xbf16, #tpu.memory_space<vmem>>, vector<2x16x32xbf16>
    %12 = vector.shape_cast %11 : vector<2x16x32xbf16> to vector<32x32xbf16>
    %c64 = arith.constant 64 : index
    %c0_11 = arith.constant 0 : index
    %13 = vector.load %arg2[%c64, %c0_11] : memref<96x128xbf16, #tpu.memory_space<vmem>>, vector<32x128xbf16>
    %cst_12 = arith.constant dense<0.000000e+00> : vector<32x128xf32>
    %14 = tpu.matmul %12, %13, %cst_12 {dimension_numbers = #tpu.dot_dimension_numbers<[1], [0], [0], [1], [0, 0, 1, 1], [], []>} : vector<32x32xbf16>, vector<32x128xbf16>, vector<32x128xf32> -> vector<32x128xf32>
    %15 = arith.addf %10, %14 : vector<32x128xf32>
    %c0_13 = arith.constant 0 : index
    %c0_14 = arith.constant 0 : index
    %16 = vector.load %arg3[%c0_13, %c0_14] : memref<1x128xf32, #tpu.memory_space<vmem>>, vector<1x128xf32>
    %17 = vector.broadcast %16 : vector<1x128xf32> to vector<32x128xf32>
    %18 = arith.addf %15, %17 : vector<32x128xf32>
    %c0_15 = arith.constant 0 : index
    %c0_16 = arith.constant 0 : index
    %19 = vector.load %arg4[%c0_15, %c0_16] : memref<32x128xf32, #tpu.memory_space<vmem>>, vector<32x128xf32>
    tpu.vector_store %arg4[%c0_15, %c0_16], %18 {strides = array<i32>} : memref<32x128xf32, #tpu.memory_space<vmem>>, vector<32x128xf32>,
    return
  }
  func.func @transform_0(%arg0: i32) -> (i32, i32, i32) {
    %c0_i32 = arith.constant 0 : i32
    %c0_i32_0 = arith.constant 0 : i32
    %c0_i32_1 = arith.constant 0 : i32
    %c0_i32_2 = arith.constant 0 : i32
    return %c0_i32, %c0_i32_0, %c0_i32_1 : i32, i32, i32
  }
  func.func @transform_1(%arg0: i32) -> (i32, i32) {
    %c0_i32 = arith.constant 0 : i32
    %c0_i32_0 = arith.constant 0 : i32
    %c0_i32_1 = arith.constant 0 : i32
    return %c0_i32, %c0_i32_0 : i32, i32
  }
  func.func @transform_2(%arg0: i32) -> (i32, i32) {
    %c0_i32 = arith.constant 0 : i32
    %c0_i32_0 = arith.constant 0 : i32
    %c0_i32_1 = arith.constant 0 : i32
    return %c0_i32, %c0_i32_0 : i32, i32
  }
  func.func @transform_3(%arg0: i32) -> (i32, i32) {
    %c0_i32 = arith.constant 0 : i32
    %c0_i32_0 = arith.constant 0 : i32
    %c0_i32_1 = arith.constant 0 : i32
    return %c0_i32, %c0_i32_0 : i32, i32
  }
}

</mosaic_0001>

<llo_original>
// kernel: conv1d_pallas.1
$region0: #{conv1d_pallas.1}
  #allocation0 [shape = 'u32[]', space=smem, size = 0x4, offset = 0x4, fixed_abs, tag = 'smem constant byte address 0x4 - core index']
  #allocation1 [shape = 'u32[72,128]{1,0:T(1,128)}', space=vmem, size = 0x9000, scoped, tag = 'internal scratch']
  %s0 = inlined_call_operand.vmem [shape: bf16[2,18,32], index: 0, kind: input, shape index: {}]
  %s1 = inlined_call_operand.vmem [shape: bf16[96,128], index: 1, kind: input, shape index: {}]
  %s2 = inlined_call_operand.vmem [shape: f32[1,128], index: 2, kind: input, shape index: {}]
  %s3 = inlined_call_operand.hbm [shape: f32[32,128], index: 3, kind: output, shape index: {}]
  %s4 = sld [smem:[#allocation0]]
  $region22: #{conv1d_pallas.1} parent=0
    _
  %s6 = ssub.s32 1, %s4
  %s7 = scalar_select 0, %s6, %s4
  $region1: #{conv1d_pallas.1} parent=0
    #allocation2 [shape = 'u8[16384]{0}', space=vmem, size = 0x4000, scoped, tag = 'output window, operand 0, single buffered']
    #allocation3 [shape = 's32[1]{0}', space=sflag, size = 0x4, scoped, tag = 'scoped memory for conv1d_pallas.1']
    %8 = vsyncpa [#allocation3], 0
    // Predicated region
    $region2: #{conv1d_pallas.1} parent=1 // pred_check
      _
    $region3: #{conv1d_pallas.1} parent=1 // pred_check_branch
      %10 = sbr.rel (0) target = $region5
    $region4: #{conv1d_pallas.1} parent=1 // pred_region
      _
    $region5: #{conv1d_pallas.1} parent=1 // pred_fallthru
      _
    // Predicated region
    $region6: #{conv1d_pallas.1} parent=1 // pred_check
      _
    $region7: #{conv1d_pallas.1} parent=1 // pred_check_branch
      %12 = sbr.rel (0) target = $region9
    $region8: #{conv1d_pallas.1} parent=1 // pred_region
      _
    $region9: #{conv1d_pallas.1} parent=1 // pred_fallthru
      _
    // Predicated region
    $region10: #{conv1d_pallas.1} parent=1 // pred_check
      _
    $region11: #{conv1d_pallas.1} parent=1 // pred_check_branch
      %14 = sbr.rel (0) target = $region13
    $region12: #{conv1d_pallas.1} parent=1 // pred_region
      _
    $region13: #{conv1d_pallas.1} parent=1 // pred_fallthru
      _
    %v16 = vld [vmem:[%s0] sm:$0xf]
    %v17 = vld [vmem:[%s0 + $0x4] sm:$0xf]
    %v18 = vld [vmem:[%s0 + $0xc] sm:$0xf]
    %v19 = vld [vmem:[%s0 + $0x10] sm:$0xf]
    %v20 = vld [vmem:[%s1] sm:$0xf]
    %v21 = vld [vmem:[%s1 + $0x4] sm:$0xf]
    %v22 = vld [vmem:[%s1 + $0x8] sm:$0xf]
    %v23 = vld [vmem:[%s1 + $0xc] sm:$0xf]
    %v24 = vld [vmem:[%s0 + $0x8] sm:$0x1]
    %v25 = vld [vmem:[%s0 + $0x14] sm:$0x1]
    %vm26 = vsmask.f32 3328
    %vm27 = vsmask.f32 7440
    %vm28 = vmor %vm26, %vm27
    %v30 = vshrl.u32 %v16, 16
    %v32 = vrot.slane %v30, 4
    %v33 = vshll.u32 %v16, 16
    %v35 = vrot.slane %v33, 5
    %v36 = vor.u32 %v32, %v35
    %v37 = vrot.slane %v36, 4
    %v39 = vshll.u32 %v17, 16
    %v41 = vrot.slane %v39, 5
    %v42 = vsel %vm28, %v37, %v41
    %v43 = vshrl.u32 %v17, 16
    %v45 = vrot.slane %v43, 4
    %v46 = vor.u32 %v45, %v41
    %v47 = vrot.slane %v46, 4
    %v49 = vshll.u32 %v24, 16
    %v51 = vrot.slane %v49, 5
    %v52 = vsel %vm28, %v47, %v51
    %v54 = vshrl.u32 %v18, 16
    %v56 = vrot.slane %v54, 4
    %v57 = vshll.u32 %v18, 16
    %v59 = vrot.slane %v57, 5
    %v60 = vor.u32 %v56, %v59
    %v61 = vrot.slane %v60, 4
    %v63 = vshll.u32 %v19, 16
    %v65 = vrot.slane %v63, 5
    %v66 = vsel %vm28, %v61, %v65
    %v67 = vshrl.u32 %v19, 16
    %v69 = vrot.slane %v67, 4
    %v70 = vor.u32 %v69, %v65
    %v71 = vrot.slane %v70, 4
    %v73 = vshll.u32 %v25, 16
    %v75 = vrot.slane %v73, 5
    %v76 = vsel %vm28, %v71, %v75
    %v77 = vld [vmem:[%s1 + $0x10] sm:$0xf]
    %v78 = vld [vmem:[%s1 + $0x14] sm:$0xf]
    %v79 = vld [vmem:[%s1 + $0x18] sm:$0xf]
    %v80 = vld [vmem:[%s1 + $0x1c] sm:$0xf]
    %v81 = vunpack.c.l.b16 %v42
    %v82 = vunpack.c.l.b16 %v52
    %v83 = vunpack.c.l.b16 %v66
    %v84 = vunpack.c.l.b16 %v76
    %v85 = vpack.c.b16 %v82, %v81
    %v86 = vpack.c.b16 %v84, %v83
    %v91 = vunpack.c.l.b16 %v77
    %v92 = vunpack.c.l.b16 %v78
    %v93 = vunpack.c.l.b16 %v79
    %v94 = vunpack.c.l.b16 %v80
    %v95 = vpack.c.b16 %v92, %v91
    %v96 = vpack.c.b16 %v94, %v93
    %vm99 = vcmask 261120
    %v101 = vsel %vm99, %v85, 0
    %v104 = vsel %vm99, %v86, 0
    %106 = vmatpush.bf16.msra.mxu0 0
    %107 = vmatpush.bf16.msra.mxu0 0
    %108 = vmatpush.bf16.msra.mxu0 0
    %109 = vmatpush.bf16.msra.mxu0 0
    %110 = vmatpush.bf16.msra.mxu0 0
    %111 = vmatpush.bf16.msra.mxu0 0
    %112 = vmatpush.bf16.msra.mxu0 %v96
    %113 = vmatpush.bf16.msra.mxu0 %v95
    %114 = vmatmul.bf16.gmra.mxu0 %v101
    %v115 = vpop.f32.mrf.mxu0
    %v116 = vadd.f32 0.0, %v115
    %v117 = vpop.f32.mrf.mxu0
    %v118 = vadd.f32 0.0, %v117
    %119 = vmatmul.bf16.gmra.mxu0 %v104
    %v120 = vpop.f32.mrf.mxu0
    %v121 = vadd.f32 0.0, %v120
    %v122 = vpop.f32.mrf.mxu0
    %v123 = vadd.f32 0.0, %v122
    %124 = vdwg.mxu0
    %v129 = vunpack.c.l.b16 %v16
    %v130 = vunpack.c.l.b16 %v17
    %v131 = vunpack.c.l.b16 %v18
    %v132 = vunpack.c.l.b16 %v19
    %v133 = vpack.c.b16 %v130, %v129
    %v134 = vpack.c.b16 %v132, %v131
    %v139 = vunpack.c.l.b16 %v20
    %v140 = vunpack.c.l.b16 %v21
    %v141 = vunpack.c.l.b16 %v22
    %v142 = vunpack.c.l.b16 %v23
    %v143 = vpack.c.b16 %v140, %v139
    %v144 = vpack.c.b16 %v142, %v141
    %v148 = vsel %vm99, %v133, 0
    %v151 = vsel %vm99, %v134, 0
    %153 = vmatpush.bf16.msra.mxu0 0
    %154 = vmatpush.bf16.msra.mxu0 0
    %155 = vmatpush.bf16.msra.mxu0 0
    %156 = vmatpush.bf16.msra.mxu0 0
    %157 = vmatpush.bf16.msra.mxu0 0
    %158 = vmatpush.bf16.msra.mxu0 0
    %159 = vmatpush.bf16.msra.mxu0 %v144
    %160 = vmatpush.bf16.msra.mxu0 %v143
    %161 = vmatmul.bf16.gmra.mxu0 %v148
    %v162 = vpop.f32.mrf.mxu0
    %v163 = vadd.f32 %v116, %v162
    %v164 = vpop.f32.mrf.mxu0
    %v165 = vadd.f32 %v118, %v164
    %166 = vmatmul.bf16.gmra.mxu0 %v151
    %v167 = vpop.f32.mrf.mxu0
    %v168 = vadd.f32 %v121, %v167
    %v169 = vpop.f32.mrf.mxu0
    %v170 = vadd.f32 %v123, %v169
    %171 = vdwg.mxu0
    %v172 = vld [vmem:[%s0] sm:$0xe]
    %v173 = vld [vmem:[%s0 + $0xc] sm:$0xe]
    %vm178 = vcmask 1042432
    %vm179 = vcmask 1046532
    %vm180 = vmor %vm178, %vm179
    %v181 = vrot.slane %v172, 5
    %v182 = vrot.slane %v181, 4
    %v183 = vrot.slane %v17, 5
    %v184 = vsel %vm180, %v182, %v183
    %v185 = vrot.slane %v183, 4
    %v186 = vrot.slane %v24, 5
    %v187 = vsel %vm180, %v185, %v186
    %v188 = vrot.slane %v173, 5
    %v189 = vrot.slane %v188, 4
    %v190 = vrot.slane %v19, 5
    %v191 = vsel %vm180, %v189, %v190
    %v192 = vrot.slane %v190, 4
    %v193 = vrot.slane %v25, 5
    %v194 = vsel %vm180, %v192, %v193
    %v195 = vld [vmem:[%s1 + $0x20] sm:$0xf]
    %v196 = vld [vmem:[%s1 + $0x24] sm:$0xf]
    %v197 = vld [vmem:[%s1 + $0x28] sm:$0xf]
    %v198 = vld [vmem:[%s1 + $0x2c] sm:$0xf]
    %v199 = vunpack.c.l.b16 %v184
    %v200 = vunpack.c.l.b16 %v187
    %v201 = vunpack.c.l.b16 %v191
    %v202 = vunpack.c.l.b16 %v194
    %v203 = vpack.c.b16 %v200, %v199
    %v204 = vpack.c.b16 %v202, %v201
    %v209 = vunpack.c.l.b16 %v195
    %v210 = vunpack.c.l.b16 %v196
    %v211 = vunpack.c.l.b16 %v197
    %v212 = vunpack.c.l.b16 %v198
    %v213 = vpack.c.b16 %v210, %v209
    %v214 = vpack.c.b16 %v212, %v211
    %v218 = vsel %vm99, %v203, 0
    %v221 = vsel %vm99, %v204, 0
    %223 = vmatpush.bf16.msra.mxu0 0
    %224 = vmatpush.bf16.msra.mxu0 0
    %225 = vmatpush.bf16.msra.mxu0 0
    %226 = vmatpush.bf16.msra.mxu0 0
    %227 = vmatpush.bf16.msra.mxu0 0
    %228 = vmatpush.bf16.msra.mxu0 0
    %229 = vmatpush.bf16.msra.mxu0 %v214
    %230 = vmatpush.bf16.msra.mxu0 %v213
    %231 = vmatmul.bf16.gmra.mxu0 %v218
    %v232 = vpop.f32.mrf.mxu0
    %v233 = vadd.f32 0.0, %v232
    %v234 = vpop.f32.mrf.mxu0
    %v235 = vadd.f32 0.0, %v234
    %236 = vmatmul.bf16.gmra.mxu0 %v221
    %v237 = vpop.f32.mrf.mxu0
    %v238 = vadd.f32 0.0, %v237
    %v239 = vpop.f32.mrf.mxu0
    %v240 = vadd.f32 0.0, %v239
    %241 = vdwg.mxu0
    %v242 = vadd.f32 %v163, %v233
    %v243 = vadd.f32 %v165, %v235
    %v244 = vadd.f32 %v168, %v238
    %v245 = vadd.f32 %v170, %v240
    %v246 = vld [vmem:[%s2] sm:$0x1]
    %v248 = vperm.slane %v246, 0
    %v250 = vadd.f32 %v242, %v248
    %v251 = vadd.f32 %v243, %v248
    %v252 = vadd.f32 %v244, %v248
    %v253 = vadd.f32 %v245, %v248
    %254 = vst [vmem:[#allocation2] sm:$0xff] %v250
    %255 = vst [vmem:[#allocation2 + $0x8] sm:$0xff] %v251
    %256 = vst [vmem:[#allocation2 + $0x10] sm:$0xff] %v252
    %257 = vst [vmem:[#allocation2 + $0x18] sm:$0xff] %v253
    // Predicated region
    $region14: #{conv1d_pallas.1} parent=1 // pred_check
      _
    $region15: #{conv1d_pallas.1} parent=1 // pred_check_branch
      %259 = sbr.rel (0) target = $region17
    $region16: #{conv1d_pallas.1} parent=1 // pred_region
      %261 = vsyncadd [#allocation3], 0
      %s262 = sshll.u32 [#allocation2], 4
      %s263 = int_to_ptr.vmem [resolvable:$true] %s262
      %s264 = sshll.u32 %s3, 4
      %s265 = int_to_ptr.hbm [resolvable:$true] %s264
      %270 = dma.vmem_to_hbm [thread:$0]  %s263, 512, %s265, [#allocation3], 128, 128, 8
    $region17: #{conv1d_pallas.1} parent=1 // pred_fallthru
      _
    // Predicated region
    $region18: #{conv1d_pallas.1} parent=1 // pred_check
      _
    $region19: #{conv1d_pallas.1} parent=1 // pred_check_branch
      %272 = sbr.rel (0) target = $region21
    $region20: #{conv1d_pallas.1} parent=1 // pred_region
      %274 = dma.done [#allocation3], 512
    $region21: #{conv1d_pallas.1} parent=1 // pred_fallthru
      _
    %275 = vsyncpa [#allocation3], 1

</llo_original>
